<compile_context>
chip_gen: v6e
topology: v6e:2x2x1
jax: 0.10.0
libtpu: 0.0.40
codegen_flags: <defaults>
</compile_context>

<pallas_src>
import functools

import jax
import jax.numpy as jnp
from jax.experimental import pallas as pl
from jax.experimental.pallas import tpu as pltpu


def _attention_kernel(x_ref, wqkv_ref, wout_ref, bout_ref, hmask_ref, smask_ref,
                      *refs, heads, tokens, scale, batch_block, emit_logits):
    # x_ref:     (R, C)        R = batch_block * tokens rows of this grid step
    # wqkv_ref:  (3, C, C)     [Wq, Wk, Wv], resident across grid
    # wout_ref:  (C, C) bf16   output projection weight, resident
    # bout_ref:  (1, C)        output projection bias, resident
    # hmask_ref: (H*N, C)      block-diagonal key-slot/channel head mask (static)
    # smask_ref: (H*N, H*N)    block-diagonal segment mask (static)
    # refs:      out_ref (R, C) [, dots_ref (R, H*N)] , ctx scratch (R, C) f32
    if emit_logits:
        out_ref, dots_ref, ctx_ref = refs
    else:
        out_ref, ctx_ref = refs
        dots_ref = None

    x = x_ref[...]                                             # (R, C)

    # Projections folded over all rows; QK^T path stays f32, scale folded into q.
    q = jnp.dot(x, wqkv_ref[0], preferred_element_type=jnp.float32) * scale
    k = jnp.dot(x, wqkv_ref[1], preferred_element_type=jnp.float32)
    v = jnp.dot(x, wqkv_ref[2], preferred_element_type=jnp.float32)

    head_mask = hmask_ref[...]                                 # (H*N, C)
    seg_mask = smask_ref[...]                                  # (H*N, H*N)

    # Per-batch attention slabs (compile-time unrolled; batch_block is small).
    for b in range(batch_block):
        r0 = b * tokens                                        # sublane-aligned
        qb = q[r0:r0 + tokens]                                 # (N, C)
        kb = k[r0:r0 + tokens]
        vb = v[r0:r0 + tokens]

        # Block-diagonal replicated k/v: one MXU contraction per step, no
        # per-head loop, no lane-splitting reshapes.
        k_bd = jnp.tile(kb, (heads, 1)) * head_mask            # (H*N, C) f32
        v_bd = (jnp.tile(vb, (heads, 1)) * head_mask).astype(jnp.bfloat16)

        # dots[i, h*N + j] = sum_{c in head h} q[i, c] * k[j, c]  (scaled)
        dots = jax.lax.dot_general(qb, k_bd, (((1,), (1,)), ((), ())),
                                   preferred_element_type=jnp.float32)  # (N, H*N)
        if dots_ref is not None:
            dots_ref[r0:r0 + tokens, :] = dots                 # unmasked 128-lane store

        # Per-head softmax (stabilizer = row-global max, constant per segment).
        m = jnp.max(dots, axis=-1, keepdims=True)              # (N, 1)
        e = jnp.exp(dots - m)                                  # (N, H*N)
        denom = jnp.dot(e, seg_mask,
                        preferred_element_type=jnp.float32)    # per-segment sums
        attn = (e * pl.reciprocal(denom, approx=True)).astype(jnp.bfloat16)

        # attn @ V, already laid out as 'b h n d -> b n (h d)'.  bf16 operands.
        ctx_ref[r0:r0 + tokens, :] = jnp.dot(
            attn, v_bd, preferred_element_type=jnp.float32)    # (N, C) f32

    # Output projection folded over all rows of this block (bf16 operands).
    ctx = ctx_ref[...].astype(jnp.bfloat16)                    # (R, C)
    out = jnp.dot(ctx, wout_ref[...],
                  preferred_element_type=jnp.float32) + bout_ref[...]
    out_ref[...] = out.astype(out_ref.dtype)


def attention_forward(x, w_qkv, w_out, b_out, *, heads, scale,
                      batch_block=None, return_attn_logit=True):
    b, n, dim = x.shape
    assert dim % heads == 0, "dim must be divisible by heads"
    assert n % 8 == 0, "token count must be a sublane multiple (8)"
    d = dim // heads
    hn = heads * n                     # == 128 at the test shapes -> lane-dense logits

    if batch_block is None:
        batch_block = b                # full fold; use b // 2 on v7x with larger batches
    assert b % batch_block == 0
    rows = batch_block * n
    num_blocks = b // batch_block

    # --- layout plumbing (outside the kernel) ---
    x_flat = x.reshape(b * n, dim)
    w_qkv3 = w_qkv.reshape(dim, 3, dim).transpose(1, 0, 2)     # (3, C, C): Wq, Wk, Wv
    w_out_bf16 = w_out.astype(jnp.bfloat16)                    # bf16 value path

    # --- static block-diagonal masks, hoisted out of the kernel body ---
    seg_id = jnp.arange(hn, dtype=jnp.int32) // n              # head id of key-slot
    chan_id = jnp.arange(dim, dtype=jnp.int32) // d            # head id of channel
    head_mask = (seg_id[:, None] == chan_id[None, :]).astype(jnp.float32)  # (H*N, C)
    seg_mask = (seg_id[:, None] == seg_id[None, :]).astype(jnp.float32)    # (H*N, H*N)

    kernel = functools.partial(_attention_kernel, heads=heads, tokens=n,
                               scale=scale, batch_block=batch_block,
                               emit_logits=return_attn_logit)

    in_specs = [
        pl.BlockSpec((rows, dim), lambda i: (i, 0)),           # x rows of this block
        pl.BlockSpec((3, dim, dim), lambda i: (0, 0, 0)),      # resident weights
        pl.BlockSpec((dim, dim), lambda i: (0, 0)),
        pl.BlockSpec((1, dim), lambda i: (0, 0)),
        pl.BlockSpec((hn, dim), lambda i: (0, 0)),
        pl.BlockSpec((hn, hn), lambda i: (0, 0)),
    ]
    out_spec_x = pl.BlockSpec((rows, dim), lambda i: (i, 0))
    shape_x = jax.ShapeDtypeStruct((b * n, dim), x.dtype)
    scratch = [pltpu.VMEM((rows, dim), jnp.float32)]           # ctx staging
    params = pltpu.CompilerParams(dimension_semantics=("parallel",))
    args = (x_flat, w_qkv3, w_out_bf16, b_out, head_mask, seg_mask)

    if return_attn_logit:
        out_flat, dots_flat = pl.pallas_call(
            kernel,
            out_shape=(shape_x, jax.ShapeDtypeStruct((b * n, hn), jnp.float32)),
            grid=(num_blocks,),
            in_specs=in_specs,
            out_specs=(out_spec_x, pl.BlockSpec((rows, hn), lambda i: (i, 0))),
            scratch_shapes=scratch,
            compiler_params=params,
        )(*args)
        # lane-dense (B*N, H*N) -> (B, H, N, N): layout plumbing outside the kernel.
        dots = dots_flat.reshape(b, n, heads, n).transpose(0, 2, 1, 3)
        return {"x": out_flat.reshape(b, n, dim), "attn_logit": dots}

    out_flat = pl.pallas_call(
        kernel,
        out_shape=shape_x,
        grid=(num_blocks,),
        in_specs=in_specs,
        out_specs=out_spec_x,
        scratch_shapes=scratch,
        compiler_params=params,
    )(*args)
    return {"x": out_flat.reshape(b, n, dim)}


def reference_forward(x, w_qkv, w_out, b_out, *, heads, scale):
    """Pure-JAX reference mirroring the PyTorch forward (mask=None)."""
    b, n, dim = x.shape
    d = dim // heads
    qkv = x @ w_qkv
    q, k, v = jnp.split(qkv, 3, axis=-1)

    def to_heads(t):
        return t.reshape(b, n, heads, d).transpose(0, 2, 1, 3)

    q, k, v = map(to_heads, (q, k, v))
    dots = jnp.einsum("bhid,bhjd->bhij", q, k) * scale
    attn = jax.nn.softmax(dots, axis=-1)
    out = jnp.einsum("bhij,bhjd->bhid", attn, v)
    out = out.transpose(0, 2, 1, 3).reshape(b, n, dim)
    out = out @ w_out + b_out[0]
    return out, dots


if __name__ == "__main__":
    # Small shapes consistent with the module.  H*N = 128 -> lane-dense logits.
    B, N, DIM, HEADS = 2, 16, 64, 8
    scale = DIM ** (-0.5)              # scale_with_head=False (default)

    key = jax.random.PRNGKey(0)
    kx, kqkv, kout, kbias = jax.random.split(key, 4)

    x = jax.random.normal(kx, (B, N, DIM), dtype=jnp.float32)
    # to_qkv: Linear(dim, 3*dim, bias=False) -> stored as [dim, 3*dim]
    w_qkv = jax.random.normal(kqkv, (DIM, 3 * DIM), dtype=jnp.float32) * 0.05
    # to_out: Linear(dim, dim) (+ Dropout(0) == identity)
    w_out = jax.random.normal(kout, (DIM, DIM), dtype=jnp.float32) * 0.05
    b_out = jax.random.normal(kbias, (1, DIM), dtype=jnp.float32) * 0.05

    result = attention_forward(x, w_qkv, w_out, b_out, heads=HEADS, scale=scale)
    out_x = jax.block_until_ready(result["x"])
    dots = jax.block_until_ready(result["attn_logit"])

    ref_x, ref_dots = reference_forward(x, w_qkv, w_out, b_out,
                                        heads=HEADS, scale=scale)
    assert out_x.shape == (B, N, DIM)
    assert dots.shape == (B, HEADS, N, N)
    # logits: exact f32 path (matmul + folded scale)
    assert jnp.allclose(dots, ref_dots, atol=1e-4, rtol=1e-4)
    # output: looser tolerance due to bf16 value path + approx (EUP) reciprocal
    assert jnp.allclose(out_x, ref_x, atol=1e-2, rtol=1e-2)

    # logits-free fast path (no dots writeback / transpose) also runs clean.
    result_nl = attention_forward(x, w_qkv, w_out, b_out, heads=HEADS,
                                  scale=scale, return_attn_logit=False)
    out_nl = jax.block_until_ready(result_nl["x"])
    assert out_nl.shape == (B, N, DIM)
    assert jnp.allclose(out_nl, ref_x, atol=1e-2, rtol=1e-2)

    print("KERNEL_OK")
</pallas_src>

<mosaic_0001>
module attributes {stable_mosaic.version = 11 : i64} {
  func.func @_attention_kernel(%arg0: i32, %arg1: memref<32x64xf32, #tpu.memory_space<vmem>>, %arg2: memref<3x64x64xf32, #tpu.memory_space<vmem>>, %arg3: memref<64x64xbf16, #tpu.memory_space<vmem>>, %arg4: memref<1x64xf32, #tpu.memory_space<vmem>>, %arg5: memref<128x64xf32, #tpu.memory_space<vmem>>, %arg6: memref<128x128xf32, #tpu.memory_space<vmem>>, %arg7: memref<32x64xf32, #tpu.memory_space<vmem>>, %arg8: memref<32x128xf32, #tpu.memory_space<vmem>>, %arg9: memref<32x64xf32, #tpu.memory_space<vmem>>) attributes {dimension_semantics = [#tpu.dimension_semantics<parallel>], iteration_bounds = array<i64: 1>, scalar_prefetch = 0 : i64, scratch_operands = 1 : i64, tpu.core_type = #tpu.core_type<tc>, window_params = [{transform_indices = @transform_0, window_bounds = array<i64: 32, 64>}, {pipeline_mode = #tpu.pipeline_mode<synchronous>, transform_indices = @transform_1, window_bounds = array<i64: 3, 64, 64>}, {pipeline_mode = #tpu.pipeline_mode<synchronous>, transform_indices = @transform_2, window_bounds = array<i64: 64, 64>}, {pipeline_mode = #tpu.pipeline_mode<synchronous>, transform_indices = @transform_3, window_bounds = array<i64: 1, 64>}, {pipeline_mode = #tpu.pipeline_mode<synchronous>, transform_indices = @transform_4, window_bounds = array<i64: 128, 64>}, {pipeline_mode = #tpu.pipeline_mode<synchronous>, transform_indices = @transform_5, window_bounds = array<i64: 128, 128>}, {transform_indices = @transform_6, window_bounds = array<i64: 32, 64>}, {transform_indices = @transform_7, window_bounds = array<i64: 32, 128>}]} {
    %c0 = arith.constant 0 : index
    %c0_0 = arith.constant 0 : index
    %0 = vector.load %arg1[%c0, %c0_0] : memref<32x64xf32, #tpu.memory_space<vmem>>, vector<32x64xf32>
    %c0_1 = arith.constant 0 : index
    %c0_2 = arith.constant 0 : index
    %c0_3 = arith.constant 0 : index
    %1 = vector.load %arg2[%c0_1, %c0_2, %c0_3] : memref<3x64x64xf32, #tpu.memory_space<vmem>>, vector<1x64x64xf32>
    %2 = vector.shape_cast %1 : vector<1x64x64xf32> to vector<64x64xf32>
    %cst = arith.constant dense<0.000000e+00> : vector<32x64xf32>
    %3 = tpu.matmul %0, %2, %cst {dimension_numbers = #tpu.dot_dimension_numbers<[1], [0], [0], [1], [0, 0, 1, 1], [], []>} : vector<32x64xf32>, vector<64x64xf32>, vector<32x64xf32> -> vector<32x64xf32>
    %cst_4 = arith.constant 1.250000e-01 : f32
    %4 = vector.broadcast %cst_4 : f32 to vector<32x64xf32>
    %5 = arith.mulf %3, %4 : vector<32x64xf32>
    %c1 = arith.constant 1 : index
    %c0_5 = arith.constant 0 : index
    %c0_6 = arith.constant 0 : index
    %6 = vector.load %arg2[%c1, %c0_5, %c0_6] : memref<3x64x64xf32, #tpu.memory_space<vmem>>, vector<1x64x64xf32>
    %7 = vector.shape_cast %6 : vector<1x64x64xf32> to vector<64x64xf32>
    %cst_7 = arith.constant dense<0.000000e+00> : vector<32x64xf32>
    %8 = tpu.matmul %0, %7, %cst_7 {dimension_numbers = #tpu.dot_dimension_numbers<[1], [0], [0], [1], [0, 0, 1, 1], [], []>} : vector<32x64xf32>, vector<64x64xf32>, vector<32x64xf32> -> vector<32x64xf32>
    %c2 = arith.constant 2 : index
    %c0_8 = arith.constant 0 : index
    %c0_9 = arith.constant 0 : index
    %9 = vector.load %arg2[%c2, %c0_8, %c0_9] : memref<3x64x64xf32, #tpu.memory_space<vmem>>, vector<1x64x64xf32>
    %10 = vector.shape_cast %9 : vector<1x64x64xf32> to vector<64x64xf32>
    %cst_10 = arith.constant dense<0.000000e+00> : vector<32x64xf32>
    %11 = tpu.matmul %0, %10, %cst_10 {dimension_numbers = #tpu.dot_dimension_numbers<[1], [0], [0], [1], [0, 0, 1, 1], [], []>} : vector<32x64xf32>, vector<64x64xf32>, vector<32x64xf32> -> vector<32x64xf32>
    %c0_11 = arith.constant 0 : index
    %c0_12 = arith.constant 0 : index
    %12 = vector.load %arg5[%c0_11, %c0_12] : memref<128x64xf32, #tpu.memory_space<vmem>>, vector<128x64xf32>
    %c0_13 = arith.constant 0 : index
    %c0_14 = arith.constant 0 : index
    %13 = vector.load %arg6[%c0_13, %c0_14] : memref<128x128xf32, #tpu.memory_space<vmem>>, vector<128x128xf32>
    %14 = vector.extract_strided_slice %5 {offsets = [0, 0], sizes = [16, 64], strides = [1, 1]} : vector<32x64xf32> to vector<16x64xf32>
    %15 = vector.extract_strided_slice %8 {offsets = [0, 0], sizes = [16, 64], strides = [1, 1]} : vector<32x64xf32> to vector<16x64xf32>
    %16 = vector.extract_strided_slice %11 {offsets = [0, 0], sizes = [16, 64], strides = [1, 1]} : vector<32x64xf32> to vector<16x64xf32>
    %17 = tpu.concatenate %15, %15, %15, %15, %15, %15, %15, %15 in 0 : vector<16x64xf32>, vector<16x64xf32>, vector<16x64xf32>, vector<16x64xf32>, vector<16x64xf32>, vector<16x64xf32>, vector<16x64xf32>, vector<16x64xf32> -> vector<128x64xf32>
    %18 = arith.mulf %17, %12 : vector<128x64xf32>
    %19 = tpu.concatenate %16, %16, %16, %16, %16, %16, %16, %16 in 0 : vector<16x64xf32>, vector<16x64xf32>, vector<16x64xf32>, vector<16x64xf32>, vector<16x64xf32>, vector<16x64xf32>, vector<16x64xf32>, vector<16x64xf32> -> vector<128x64xf32>
    %20 = arith.mulf %19, %12 : vector<128x64xf32>
    %21 = arith.truncf %20 : vector<128x64xf32> to vector<128x64xbf16>
    %cst_15 = arith.constant dense<0.000000e+00> : vector<16x128xf32>
    %22 = tpu.matmul %14, %18, %cst_15 {dimension_numbers = #tpu.dot_dimension_numbers<[1], [1], [0], [0], [0, 0, 1, 0], [], []>} : vector<16x64xf32>, vector<128x64xf32>, vector<16x128xf32> -> vector<16x128xf32>
    %c0_16 = arith.constant 0 : index
    %c0_17 = arith.constant 0 : index
    %23 = vector.load %arg8[%c0_16, %c0_17] : memref<32x128xf32, #tpu.memory_space<vmem>>, vector<16x128xf32>
    tpu.vector_store %arg8[%c0_16, %c0_17], %22 {strides = array<i32>} : memref<32x128xf32, #tpu.memory_space<vmem>>, vector<16x128xf32>,
    %cst_18 = arith.constant dense<0xFF800000> : vector<16xf32>
    %24 = vector.multi_reduction <maximumf>, %22, %cst_18 [1] : vector<16x128xf32> to vector<16xf32>
    %25 = vector.shape_cast %24 : vector<16xf32> to vector<16x1xf32>
    %26 = vector.broadcast %25 : vector<16x1xf32> to vector<16x128xf32>
    %27 = arith.subf %22, %26 : vector<16x128xf32>
    %28 = math.exp %27 : vector<16x128xf32>
    %cst_19 = arith.constant dense<0.000000e+00> : vector<16x128xf32>
    %29 = tpu.matmul %28, %13, %cst_19 {dimension_numbers = #tpu.dot_dimension_numbers<[1], [0], [0], [1], [0, 0, 1, 1], [], []>} : vector<16x128xf32>, vector<128x128xf32>, vector<16x128xf32> -> vector<16x128xf32>
    %30 = tpu.reciprocal %29 {approx = true} : vector<16x128xf32> -> vector<16x128xf32>
    %31 = arith.mulf %28, %30 : vector<16x128xf32>
    %32 = arith.truncf %31 : vector<16x128xf32> to vector<16x128xbf16>
    %cst_20 = arith.constant dense<0.000000e+00> : vector<16x64xf32>
    %33 = tpu.matmul %32, %21, %cst_20 {dimension_numbers = #tpu.dot_dimension_numbers<[1], [0], [0], [1], [0, 0, 1, 1], [], []>} : vector<16x128xbf16>, vector<128x64xbf16>, vector<16x64xf32> -> vector<16x64xf32>
    %c0_21 = arith.constant 0 : index
    %c0_22 = arith.constant 0 : index
    %34 = vector.load %arg9[%c0_21, %c0_22] : memref<32x64xf32, #tpu.memory_space<vmem>>, vector<16x64xf32>
    tpu.vector_store %arg9[%c0_21, %c0_22], %33 {strides = array<i32>} : memref<32x64xf32, #tpu.memory_space<vmem>>, vector<16x64xf32>,
    %35 = vector.extract_strided_slice %5 {offsets = [16, 0], sizes = [16, 64], strides = [1, 1]} : vector<32x64xf32> to vector<16x64xf32>
    %36 = vector.extract_strided_slice %8 {offsets = [16, 0], sizes = [16, 64], strides = [1, 1]} : vector<32x64xf32> to vector<16x64xf32>
    %37 = vector.extract_strided_slice %11 {offsets = [16, 0], sizes = [16, 64], strides = [1, 1]} : vector<32x64xf32> to vector<16x64xf32>
    %38 = tpu.concatenate %36, %36, %36, %36, %36, %36, %36, %36 in 0 : vector<16x64xf32>, vector<16x64xf32>, vector<16x64xf32>, vector<16x64xf32>, vector<16x64xf32>, vector<16x64xf32>, vector<16x64xf32>, vector<16x64xf32> -> vector<128x64xf32>
    %39 = arith.mulf %38, %12 : vector<128x64xf32>
    %40 = tpu.concatenate %37, %37, %37, %37, %37, %37, %37, %37 in 0 : vector<16x64xf32>, vector<16x64xf32>, vector<16x64xf32>, vector<16x64xf32>, vector<16x64xf32>, vector<16x64xf32>, vector<16x64xf32>, vector<16x64xf32> -> vector<128x64xf32>
    %41 = arith.mulf %40, %12 : vector<128x64xf32>
    %42 = arith.truncf %41 : vector<128x64xf32> to vector<128x64xbf16>
    %cst_23 = arith.constant dense<0.000000e+00> : vector<16x128xf32>
    %43 = tpu.matmul %35, %39, %cst_23 {dimension_numbers = #tpu.dot_dimension_numbers<[1], [1], [0], [0], [0, 0, 1, 0], [], []>} : vector<16x64xf32>, vector<128x64xf32>, vector<16x128xf32> -> vector<16x128xf32>
    %c16 = arith.constant 16 : index
    %c0_24 = arith.constant 0 : index
    %44 = vector.load %arg8[%c16, %c0_24] : memref<32x128xf32, #tpu.memory_space<vmem>>, vector<16x128xf32>
    tpu.vector_store %arg8[%c16, %c0_24], %43 {strides = array<i32>} : memref<32x128xf32, #tpu.memory_space<vmem>>, vector<16x128xf32>,
    %cst_25 = arith.constant dense<0xFF800000> : vector<16xf32>
    %45 = vector.multi_reduction <maximumf>, %43, %cst_25 [1] : vector<16x128xf32> to vector<16xf32>
    %46 = vector.shape_cast %45 : vector<16xf32> to vector<16x1xf32>
    %47 = vector.broadcast %46 : vector<16x1xf32> to vector<16x128xf32>
    %48 = arith.subf %43, %47 : vector<16x128xf32>
    %49 = math.exp %48 : vector<16x128xf32>
    %cst_26 = arith.constant dense<0.000000e+00> : vector<16x128xf32>
    %50 = tpu.matmul %49, %13, %cst_26 {dimension_numbers = #tpu.dot_dimension_numbers<[1], [0], [0], [1], [0, 0, 1, 1], [], []>} : vector<16x128xf32>, vector<128x128xf32>, vector<16x128xf32> -> vector<16x128xf32>
    %51 = tpu.reciprocal %50 {approx = true} : vector<16x128xf32> -> vector<16x128xf32>
    %52 = arith.mulf %49, %51 : vector<16x128xf32>
    %53 = arith.truncf %52 : vector<16x128xf32> to vector<16x128xbf16>
    %cst_27 = arith.constant dense<0.000000e+00> : vector<16x64xf32>
    %54 = tpu.matmul %53, %42, %cst_27 {dimension_numbers = #tpu.dot_dimension_numbers<[1], [0], [0], [1], [0, 0, 1, 1], [], []>} : vector<16x128xbf16>, vector<128x64xbf16>, vector<16x64xf32> -> vector<16x64xf32>
    %c16_28 = arith.constant 16 : index
    %c0_29 = arith.constant 0 : index
    %55 = vector.load %arg9[%c16_28, %c0_29] : memref<32x64xf32, #tpu.memory_space<vmem>>, vector<16x64xf32>
    tpu.vector_store %arg9[%c16_28, %c0_29], %54 {strides = array<i32>} : memref<32x64xf32, #tpu.memory_space<vmem>>, vector<16x64xf32>,
    %c0_30 = arith.constant 0 : index
    %c0_31 = arith.constant 0 : index
    %56 = vector.load %arg9[%c0_30, %c0_31] : memref<32x64xf32, #tpu.memory_space<vmem>>, vector<32x64xf32>
    %57 = arith.truncf %56 : vector<32x64xf32> to vector<32x64xbf16>
    %c0_32 = arith.constant 0 : index
    %c0_33 = arith.constant 0 : index
    %58 = vector.load %arg3[%c0_32, %c0_33] : memref<64x64xbf16, #tpu.memory_space<vmem>>, vector<64x64xbf16>
    %cst_34 = arith.constant dense<0.000000e+00> : vector<32x64xf32>
    %59 = tpu.matmul %57, %58, %cst_34 {dimension_numbers = #tpu.dot_dimension_numbers<[1], [0], [0], [1], [0, 0, 1, 1], [], []>} : vector<32x64xbf16>, vector<64x64xbf16>, vector<32x64xf32> -> vector<32x64xf32>
    %c0_35 = arith.constant 0 : index
    %c0_36 = arith.constant 0 : index
    %60 = vector.load %arg4[%c0_35, %c0_36] : memref<1x64xf32, #tpu.memory_space<vmem>>, vector<1x64xf32>
    %61 = vector.broadcast %60 : vector<1x64xf32> to vector<32x64xf32>
    %62 = arith.addf %59, %61 : vector<32x64xf32>
    %c0_37 = arith.constant 0 : index
    %c0_38 = arith.constant 0 : index
    %63 = vector.load %arg7[%c0_37, %c0_38] : memref<32x64xf32, #tpu.memory_space<vmem>>, vector<32x64xf32>
    tpu.vector_store %arg7[%c0_37, %c0_38], %62 {strides = array<i32>} : memref<32x64xf32, #tpu.memory_space<vmem>>, vector<32x64xf32>,
    return
  }
  func.func @transform_0(%arg0: i32) -> (i32, i32) {
    %c0_i32 = arith.constant 0 : i32
    %c0_i32_0 = arith.constant 0 : i32
    return %arg0, %c0_i32 : i32, i32
  }
  func.func @transform_1(%arg0: i32) -> (i32, i32, i32) {
    %c0_i32 = arith.constant 0 : i32
    %c0_i32_0 = arith.constant 0 : i32
    %c0_i32_1 = arith.constant 0 : i32
    %c0_i32_2 = arith.constant 0 : i32
    return %c0_i32, %c0_i32_0, %c0_i32_1 : i32, i32, i32
  }
  func.func @transform_2(%arg0: i32) -> (i32, i32) {
    %c0_i32 = arith.constant 0 : i32
    %c0_i32_0 = arith.constant 0 : i32
    %c0_i32_1 = arith.constant 0 : i32
    return %c0_i32, %c0_i32_0 : i32, i32
  }
  func.func @transform_3(%arg0: i32) -> (i32, i32) {
    %c0_i32 = arith.constant 0 : i32
    %c0_i32_0 = arith.constant 0 : i32
    %c0_i32_1 = arith.constant 0 : i32
    return %c0_i32, %c0_i32_0 : i32, i32
  }
  func.func @transform_4(%arg0: i32) -> (i32, i32) {
    %c0_i32 = arith.constant 0 : i32
    %c0_i32_0 = arith.constant 0 : i32
    %c0_i32_1 = arith.constant 0 : i32
    return %c0_i32, %c0_i32_0 : i32, i32
  }
  func.func @transform_5(%arg0: i32) -> (i32, i32) {
    %c0_i32 = arith.constant 0 : i32
    %c0_i32_0 = arith.constant 0 : i32
    %c0_i32_1 = arith.constant 0 : i32
    return %c0_i32, %c0_i32_0 : i32, i32
  }
  func.func @transform_6(%arg0: i32) -> (i32, i32) {
    %c0_i32 = arith.constant 0 : i32
    %c0_i32_0 = arith.constant 0 : i32
    return %arg0, %c0_i32 : i32, i32
  }
  func.func @transform_7(%arg0: i32) -> (i32, i32) {
    %c0_i32 = arith.constant 0 : i32
    %c0_i32_0 = arith.constant 0 : i32
    return %arg0, %c0_i32 : i32, i32
  }
}

</mosaic_0001>

<llo_original>
// kernel: tpu_custom_call.1
$region0: #{tpu_custom_call.1}
  #allocation0 [shape = 'u32[]', space=smem, size = 0x4, offset = 0x4, fixed_abs, tag = 'smem constant byte address 0x4 - core index']
  #allocation1 [shape = 'u32[144,128]{1,0:T(1,128)}', space=vmem, size = 0x12000, scoped, tag = 'internal scratch']
  #allocation2 [shape = 'f32[32,64]{1,0:T(8,128)}', space=vmem, size = 0x4000, scoped, tag = 'scratch operand']
  %s0 = inlined_call_operand.hbm [shape: f32[32,64], index: 0, kind: input, shape index: {}]
  %s1 = inlined_call_operand.vmem [shape: f32[3,64,64], index: 1, kind: input, shape index: {}]
  %s2 = inlined_call_operand.hbm [shape: bf16[64,64], index: 2, kind: input, shape index: {}]
  %s3 = inlined_call_operand.vmem [shape: f32[1,64], index: 3, kind: input, shape index: {}]
  %s4 = inlined_call_operand.vmem [shape: f32[128,64], index: 4, kind: input, shape index: {}]
  %s5 = inlined_call_operand.hbm [shape: f32[128,128], index: 5, kind: input, shape index: {}]
  %s6 = inlined_call_operand.hbm [shape: f32[32,64], index: 6, kind: output, shape index: {0}]
  %s7 = inlined_call_operand.hbm [shape: f32[32,128], index: 7, kind: output, shape index: {1}]
  %8 = xla_tuple %s6, %s7
  %s9 = sld [smem:[#allocation0]]
  $region54: #{tpu_custom_call.1} parent=0
    _
  %s11 = ssub.s32 1, %s9
  %s12 = scalar_select 0, %s11, %s9
  $region1: #{tpu_custom_call.1} parent=0
    #allocation3 [shape = 'u8[16384]{0}', space=vmem, size = 0x4000, scoped, tag = 'input window, operand 0, single buffered']
    #allocation4 [shape = 's32[1]{0}', space=sflag, size = 0x4, scoped, tag = 'scoped memory for tpu_custom_call.1']
    #allocation5 [shape = 's32[1]{0}', space=sflag, size = 0x4, scoped, tag = 'scoped memory for tpu_custom_call.1']
    #allocation6 [shape = 'u8[16384]{0}', space=vmem, size = 0x4000, scoped, tag = 'input window, operand 2, single buffered']
    #allocation7 [shape = 's32[1]{0}', space=sflag, size = 0x4, scoped, tag = 'scoped memory for tpu_custom_call.1']
    #allocation8 [shape = 'u8[65536]{0}', space=vmem, size = 0x10000, scoped, tag = 'input window, operand 5, single buffered']
    #allocation9 [shape = 'u8[16384]{0}', space=vmem, size = 0x4000, scoped, tag = 'output window, operand 0, single buffered']
    #allocation10 [shape = 'u8[16384]{0}', space=vmem, size = 0x4000, scoped, tag = 'output window, operand 1, single buffered']
    #allocation11 [shape = 's32[1]{0}', space=sflag, size = 0x4, scoped, tag = 'scoped memory for tpu_custom_call.1']
    %13 = vsyncpa [#allocation4], 0
    %14 = vsyncpa [#allocation7], 0
    %15 = vsyncpa [#allocation5], 0
    %16 = vsyncpa [#allocation11], 0
    // Predicated region
    $region2: #{tpu_custom_call.1} parent=1 // pred_check
      _
    $region3: #{tpu_custom_call.1} parent=1 // pred_check_branch
      %18 = sbr.rel (0) target = $region5
    $region4: #{tpu_custom_call.1} parent=1 // pred_region
      %s20 = ssub.s32 512, 512
      %21 = vsyncadd [#allocation4], %s20
      %s22 = sshll.u32 [#allocation3], 4
      %s23 = int_to_ptr.vmem [resolvable:$true] %s22
      %28 = dma.hbm_to_vmem [thread:$0]  %s0, 512, %s23, [#allocation4], 128, 128, 8
    $region5: #{tpu_custom_call.1} parent=1 // pred_fallthru
      _
    // Predicated region
    $region6: #{tpu_custom_call.1} parent=1 // pred_check
      _
    $region7: #{tpu_custom_call.1} parent=1 // pred_check_branch
      %30 = sbr.rel (0) target = $region9
    $region8: #{tpu_custom_call.1} parent=1 // pred_region
      _
    $region9: #{tpu_custom_call.1} parent=1 // pred_fallthru
      _
    // Predicated region
    $region10: #{tpu_custom_call.1} parent=1 // pred_check
      _
    $region11: #{tpu_custom_call.1} parent=1 // pred_check_branch
      %32 = sbr.rel (0) target = $region13
    $region12: #{tpu_custom_call.1} parent=1 // pred_region
      %s34 = ssub.s32 512, 512
      %35 = vsyncadd [#allocation7], %s34
      %s36 = sshll.u32 [#allocation6], 4
      %s37 = int_to_ptr.vmem [resolvable:$true] %s36
      %42 = dma.hbm_to_vmem [thread:$0]  %s2, 512, %s37, [#allocation7], 64, 64, 4
    $region13: #{tpu_custom_call.1} parent=1 // pred_fallthru
      _
    // Predicated region
    $region14: #{tpu_custom_call.1} parent=1 // pred_check
      _
    $region15: #{tpu_custom_call.1} parent=1 // pred_check_branch
      %44 = sbr.rel (0) target = $region17
    $region16: #{tpu_custom_call.1} parent=1 // pred_region
      _
    $region17: #{tpu_custom_call.1} parent=1 // pred_fallthru
      _
    // Predicated region
    $region18: #{tpu_custom_call.1} parent=1 // pred_check
      _
    $region19: #{tpu_custom_call.1} parent=1 // pred_check_branch
      %46 = sbr.rel (0) target = $region21
    $region20: #{tpu_custom_call.1} parent=1 // pred_region
      _
    $region21: #{tpu_custom_call.1} parent=1 // pred_fallthru
      _
    // Predicated region
    $region22: #{tpu_custom_call.1} parent=1 // pred_check
      _
    $region23: #{tpu_custom_call.1} parent=1 // pred_check_branch
      %48 = sbr.rel (0) target = $region25
    $region24: #{tpu_custom_call.1} parent=1 // pred_region
      %s50 = ssub.s32 2048, 2048
      %51 = vsyncadd [#allocation7], %s50
      %s52 = sshll.u32 [#allocation8], 4
      %s53 = int_to_ptr.vmem [resolvable:$true] %s52
      %58 = dma.hbm_to_vmem [thread:$0]  %s5, 2048, %s53, [#allocation7], 128, 128, 8
    $region25: #{tpu_custom_call.1} parent=1 // pred_fallthru
      _
    // Predicated region
    $region26: #{tpu_custom_call.1} parent=1 // pred_check
      _
    $region27: #{tpu_custom_call.1} parent=1 // pred_check_branch
      %60 = sbr.rel (0) target = $region29
    $region28: #{tpu_custom_call.1} parent=1 // pred_region
      %61 = dma.done [#allocation4], 512
    $region29: #{tpu_custom_call.1} parent=1 // pred_fallthru
      _
    // Predicated region
    $region30: #{tpu_custom_call.1} parent=1 // pred_check
      _
    $region31: #{tpu_custom_call.1} parent=1 // pred_check_branch
      %63 = sbr.rel (0) target = $region33
    $region32: #{tpu_custom_call.1} parent=1 // pred_region
      %64 = dma.done [#allocation7], 512
    $region33: #{tpu_custom_call.1} parent=1 // pred_fallthru
      _
    // Predicated region
    $region34: #{tpu_custom_call.1} parent=1 // pred_check
      _
    $region35: #{tpu_custom_call.1} parent=1 // pred_check_branch
      %66 = sbr.rel (0) target = $region37
    $region36: #{tpu_custom_call.1} parent=1 // pred_region
      %67 = dma.done [#allocation7], 2048
    $region37: #{tpu_custom_call.1} parent=1 // pred_fallthru
      _
    %v69 = vld [vmem:[#allocation3] sm:$0xff]
    %v70 = vld [vmem:[#allocation3 + $0x8] sm:$0xff]
    %v71 = vld [vmem:[#allocation3 + $0x10] sm:$0xff]
    %v72 = vld [vmem:[#allocation3 + $0x18] sm:$0xff]
    %v73 = vld [vmem:[%s1] sm:$0xff]
    %v74 = vld [vmem:[%s1 + $0x8] sm:$0xff]
    %v75 = vld [vmem:[%s1 + $0x10] sm:$0xff]
    %v76 = vld [vmem:[%s1 + $0x18] sm:$0xff]
    %v77 = vld [vmem:[%s1 + $0x20] sm:$0xff]
    %v78 = vld [vmem:[%s1 + $0x28] sm:$0xff]
    %v79 = vld [vmem:[%s1 + $0x30] sm:$0xff]
    %v80 = vld [vmem:[%s1 + $0x38] sm:$0xff]
    %vm81 = vcmask 523264
    %v83 = vsel %vm81, %v69, 0
    %v86 = vsel %vm81, %v70, 0
    %v89 = vsel %vm81, %v71, 0
    %v92 = vsel %vm81, %v72, 0
    %94 = vmatprep.subr.mxu0 0.0
    %95 = vmatpush1.msra.mxu0 0.0
    %96 = vmatprep.subr.mxu0 0.0
    %97 = vmatpush1.msra.mxu0 0.0
    %98 = vmatprep.subr.mxu0 0.0
    %99 = vmatpush1.msra.mxu0 0.0
    %100 = vmatprep.subr.mxu0 0.0
    %101 = vmatpush1.msra.mxu0 0.0
    %102 = vmatprep.subr.mxu0 0.0
    %103 = vmatpush1.msra.mxu0 0.0
    %104 = vmatprep.subr.mxu0 0.0
    %105 = vmatpush1.msra.mxu0 0.0
    %106 = vmatprep.subr.mxu0 0.0
    %107 = vmatpush1.msra.mxu0 0.0
    %108 = vmatprep.subr.mxu0 0.0
    %109 = vmatpush1.msra.mxu0 0.0
    %110 = vmatprep.subr.mxu0 0.0
    %111 = vmatpush1.msra.mxu0 %v80
    %112 = vmatprep.subr.mxu0 0.0
    %113 = vmatpush1.msra.mxu0 %v79
    %114 = vmatprep.subr.mxu0 0.0
    %115 = vmatpush1.msra.mxu0 %v78
    %116 = vmatprep.subr.mxu0 0.0
    %117 = vmatpush1.msra.mxu0 %v77
    %118 = vmatprep.subr.mxu0 0.0
    %119 = vmatpush1.msra.mxu0 %v76
    %120 = vmatprep.subr.mxu0 0.0
    %121 = vmatpush1.msra.mxu0 %v75
    %122 = vmatprep.subr.mxu0 0.0
    %123 = vmatpush1.msra.mxu0 %v74
    %124 = vmatprep.subr.mxu0 0.0
    %125 = vmatpush1.msra.mxu0 %v73
    %126 = vmatprep.subr.mxu0 0.0
    %127 = vmatpush2.msra.mxu0 0.0
    %128 = vmatprep.subr.mxu0 0.0
    %129 = vmatpush2.msra.mxu0 0.0
    %130 = vmatprep.subr.mxu0 0.0
    %131 = vmatpush2.msra.mxu0 0.0
    %132 = vmatprep.subr.mxu0 0.0
    %133 = vmatpush2.msra.mxu0 0.0
    %134 = vmatprep.subr.mxu0 0.0
    %135 = vmatpush2.msra.mxu0 0.0
    %136 = vmatprep.subr.mxu0 0.0
    %137 = vmatpush2.msra.mxu0 0.0
    %138 = vmatprep.subr.mxu0 0.0
    %139 = vmatpush2.msra.mxu0 0.0
    %140 = vmatprep.subr.mxu0 0.0
    %141 = vmatpush2.msra.mxu0 0.0
    %142 = vmatprep.subr.mxu0 0.0
    %143 = vmatpush2.msra.mxu0 0.0
    %144 = vmatprep.subr.mxu0 0.0
    %145 = vmatpush2.msra.mxu0 0.0
    %146 = vmatprep.subr.mxu0 0.0
    %147 = vmatpush2.msra.mxu0 0.0
    %148 = vmatprep.subr.mxu0 0.0
    %149 = vmatpush2.msra.mxu0 0.0
    %150 = vmatprep.subr.mxu0 0.0
    %151 = vmatpush2.msra.mxu0 0.0
    %152 = vmatprep.subr.mxu0 0.0
    %153 = vmatpush2.msra.mxu0 0.0
    %154 = vmatprep.subr.mxu0 0.0
    %155 = vmatpush2.msra.mxu0 0.0
    %156 = vmatprep.subr.mxu0 0.0
    %157 = vmatpush2.msra.mxu0 0.0
    %158 = vmatprep.mubr.f32.mxu0 0.0
    %159 = vmatmul.mubr.f32.gmra.mxu0 %v83
    %v160 = vpop.f32.mrf.mxu0
    %v161 = vadd.f32 0.0, %v160
    %v162 = vpop.f32.mrf.mxu0
    %163 = vmatprep.mubr.f32.mxu0 0.0
    %164 = vmatmul.mubr.f32.gmra.mxu0 %v86
    %v165 = vpop.f32.mrf.mxu0
    %v166 = vadd.f32 0.0, %v165
    %v167 = vpop.f32.mrf.mxu0
    %168 = vmatprep.mubr.f32.mxu0 0.0
    %169 = vmatmul.mubr.f32.gmra.mxu0 %v89
    %v170 = vpop.f32.mrf.mxu0
    %v171 = vadd.f32 0.0, %v170
    %v172 = vpop.f32.mrf.mxu0
    %173 = vmatprep.mubr.f32.mxu0 0.0
    %174 = vmatmul.mubr.f32.gmra.mxu0 %v92
    %v175 = vpop.f32.mrf.mxu0
    %v176 = vadd.f32 0.0, %v175
    %v177 = vpop.f32.mrf.mxu0
    %178 = vdwg.mxu0
    %v179 = vmul.f32 %v161, 0.125
    %v180 = vmul.f32 %v166, 0.125
    %v181 = vmul.f32 %v171, 0.125
    %v182 = vmul.f32 %v176, 0.125
    %s183 = scalar_lea.vmem %s1, 64
    %v184 = vld [vmem:[%s183] sm:$0xff]
    %v185 = vld [vmem:[%s183 + $0x8] sm:$0xff]
    %v186 = vld [vmem:[%s183 + $0x10] sm:$0xff]
    %v187 = vld [vmem:[%s183 + $0x18] sm:$0xff]
    %v188 = vld [vmem:[%s183 + $0x20] sm:$0xff]
    %v189 = vld [vmem:[%s183 + $0x28] sm:$0xff]
    %v190 = vld [vmem:[%s183 + $0x30] sm:$0xff]
    %v191 = vld [vmem:[%s183 + $0x38] sm:$0xff]
    %192 = vmatprep.subr.mxu0 0.0
    %193 = vmatpush1.msra.mxu0 0.0
    %194 = vmatprep.subr.mxu0 0.0
    %195 = vmatpush1.msra.mxu0 0.0
    %196 = vmatprep.subr.mxu0 0.0
    %197 = vmatpush1.msra.mxu0 0.0
    %198 = vmatprep.subr.mxu0 0.0
    %199 = vmatpush1.msra.mxu0 0.0
    %200 = vmatprep.subr.mxu0 0.0
    %201 = vmatpush1.msra.mxu0 0.0
    %202 = vmatprep.subr.mxu0 0.0
    %203 = vmatpush1.msra.mxu0 0.0
    %204 = vmatprep.subr.mxu0 0.0
    %205 = vmatpush1.msra.mxu0 0.0
    %206 = vmatprep.subr.mxu0 0.0
    %207 = vmatpush1.msra.mxu0 0.0
    %208 = vmatprep.subr.mxu0 0.0
    %209 = vmatpush1.msra.mxu0 %v191
    %210 = vmatprep.subr.mxu0 0.0
    %211 = vmatpush1.msra.mxu0 %v190
    %212 = vmatprep.subr.mxu0 0.0
    %213 = vmatpush1.msra.mxu0 %v189
    %214 = vmatprep.subr.mxu0 0.0
    %215 = vmatpush1.msra.mxu0 %v188
    %216 = vmatprep.subr.mxu0 0.0
    %217 = vmatpush1.msra.mxu0 %v187
    %218 = vmatprep.subr.mxu0 0.0
    %219 = vmatpush1.msra.mxu0 %v186
    %220 = vmatprep.subr.mxu0 0.0
    %221 = vmatpush1.msra.mxu0 %v185
    %222 = vmatprep.subr.mxu0 0.0
    %223 = vmatpush1.msra.mxu0 %v184
    %224 = vmatprep.subr.mxu0 0.0
    %225 = vmatpush2.msra.mxu0 0.0
    %226 = vmatprep.subr.mxu0 0.0
    %227 = vmatpush2.msra.mxu0 0.0
    %228 = vmatprep.subr.mxu0 0.0
    %229 = vmatpush2.msra.mxu0 0.0
    %230 = vmatprep.subr.mxu0 0.0
    %231 = vmatpush2.msra.mxu0 0.0
    %232 = vmatprep.subr.mxu0 0.0
    %233 = vmatpush2.msra.mxu0 0.0
    %234 = vmatprep.subr.mxu0 0.0
    %235 = vmatpush2.msra.mxu0 0.0
    %236 = vmatprep.subr.mxu0 0.0
    %237 = vmatpush2.msra.mxu0 0.0
    %238 = vmatprep.subr.mxu0 0.0
    %239 = vmatpush2.msra.mxu0 0.0
    %240 = vmatprep.subr.mxu0 0.0
    %241 = vmatpush2.msra.mxu0 0.0
    %242 = vmatprep.subr.mxu0 0.0
    %243 = vmatpush2.msra.mxu0 0.0
    %244 = vmatprep.subr.mxu0 0.0
    %245 = vmatpush2.msra.mxu0 0.0
    %246 = vmatprep.subr.mxu0 0.0
    %247 = vmatpush2.msra.mxu0 0.0
    %248 = vmatprep.subr.mxu0 0.0
    %249 = vmatpush2.msra.mxu0 0.0
    %250 = vmatprep.subr.mxu0 0.0
    %251 = vmatpush2.msra.mxu0 0.0
    %252 = vmatprep.subr.mxu0 0.0
    %253 = vmatpush2.msra.mxu0 0.0
    %254 = vmatprep.subr.mxu0 0.0
    %255 = vmatpush2.msra.mxu0 0.0
    %256 = vmatprep.mubr.f32.mxu0 0.0
    %257 = vmatmul.mubr.f32.gmra.mxu0 %v83
    %v258 = vpop.f32.mrf.mxu0
    %v259 = vadd.f32 0.0, %v258
    %v260 = vpop.f32.mrf.mxu0
    %261 = vmatprep.mubr.f32.mxu0 0.0
    %262 = vmatmul.mubr.f32.gmra.mxu0 %v86
    %v263 = vpop.f32.mrf.mxu0
    %v264 = vadd.f32 0.0, %v263
    %v265 = vpop.f32.mrf.mxu0
    %266 = vmatprep.mubr.f32.mxu0 0.0
    %267 = vmatmul.mubr.f32.gmra.mxu0 %v89
    %v268 = vpop.f32.mrf.mxu0
    %v269 = vadd.f32 0.0, %v268
    %v270 = vpop.f32.mrf.mxu0
    %271 = vmatprep.mubr.f32.mxu0 0.0
    %272 = vmatmul.mubr.f32.gmra.mxu0 %v92
    %v273 = vpop.f32.mrf.mxu0
    %v274 = vadd.f32 0.0, %v273
    %v275 = vpop.f32.mrf.mxu0
    %276 = vdwg.mxu0
    %s277 = scalar_lea.vmem %s1, 128
    %v278 = vld [vmem:[%s277] sm:$0xff]
    %v279 = vld [vmem:[%s277 + $0x8] sm:$0xff]
    %v280 = vld [vmem:[%s277 + $0x10] sm:$0xff]
    %v281 = vld [vmem:[%s277 + $0x18] sm:$0xff]
    %v282 = vld [vmem:[%s277 + $0x20] sm:$0xff]
    %v283 = vld [vmem:[%s277 + $0x28] sm:$0xff]
    %v284 = vld [vmem:[%s277 + $0x30] sm:$0xff]
    %v285 = vld [vmem:[%s277 + $0x38] sm:$0xff]
    %286 = vmatprep.subr.mxu0 0.0
    %287 = vmatpush1.msra.mxu0 0.0
    %288 = vmatprep.subr.mxu0 0.0
    %289 = vmatpush1.msra.mxu0 0.0
    %290 = vmatprep.subr.mxu0 0.0
    %291 = vmatpush1.msra.mxu0 0.0
    %292 = vmatprep.subr.mxu0 0.0
    %293 = vmatpush1.msra.mxu0 0.0
    %294 = vmatprep.subr.mxu0 0.0
    %295 = vmatpush1.msra.mxu0 0.0
    %296 = vmatprep.subr.mxu0 0.0
    %297 = vmatpush1.msra.mxu0 0.0
    %298 = vmatprep.subr.mxu0 0.0
    %299 = vmatpush1.msra.mxu0 0.0
    %300 = vmatprep.subr.mxu0 0.0
    %301 = vmatpush1.msra.mxu0 0.0
    %302 = vmatprep.subr.mxu0 0.0
    %303 = vmatpush1.msra.mxu0 %v285
    %304 = vmatprep.subr.mxu0 0.0
    %305 = vmatpush1.msra.mxu0 %v284
    %306 = vmatprep.subr.mxu0 0.0
    %307 = vmatpush1.msra.mxu0 %v283
    %308 = vmatprep.subr.mxu0 0.0
    %309 = vmatpush1.msra.mxu0 %v282
    %310 = vmatprep.subr.mxu0 0.0
    %311 = vmatpush1.msra.mxu0 %v281
    %312 = vmatprep.subr.mxu0 0.0
    %313 = vmatpush1.msra.mxu0 %v280
    %314 = vmatprep.subr.mxu0 0.0
    %315 = vmatpush1.msra.mxu0 %v279
    %316 = vmatprep.subr.mxu0 0.0
    %317 = vmatpush1.msra.mxu0 %v278
    %318 = vmatprep.subr.mxu0 0.0
    %319 = vmatpush2.msra.mxu0 0.0
    %320 = vmatprep.subr.mxu0 0.0
    %321 = vmatpush2.msra.mxu0 0.0
    %322 = vmatprep.subr.mxu0 0.0
    %323 = vmatpush2.msra.mxu0 0.0
    %324 = vmatprep.subr.mxu0 0.0
    %325 = vmatpush2.msra.mxu0 0.0
    %326 = vmatprep.subr.mxu0 0.0
    %327 = vmatpush2.msra.mxu0 0.0
    %328 = vmatprep.subr.mxu0 0.0
    %329 = vmatpush2.msra.mxu0 0.0
    %330 = vmatprep.subr.mxu0 0.0
    %331 = vmatpush2.msra.mxu0 0.0
    %332 = vmatprep.subr.mxu0 0.0
    %333 = vmatpush2.msra.mxu0 0.0
    %334 = vmatprep.subr.mxu0 0.0
    %335 = vmatpush2.msra.mxu0 0.0
    %336 = vmatprep.subr.mxu0 0.0
    %337 = vmatpush2.msra.mxu0 0.0
    %338 = vmatprep.subr.mxu0 0.0
    %339 = vmatpush2.msra.mxu0 0.0
    %340 = vmatprep.subr.mxu0 0.0
    %341 = vmatpush2.msra.mxu0 0.0
    %342 = vmatprep.subr.mxu0 0.0
    %343 = vmatpush2.msra.mxu0 0.0
    %344 = vmatprep.subr.mxu0 0.0
    %345 = vmatpush2.msra.mxu0 0.0
    %346 = vmatprep.subr.mxu0 0.0
    %347 = vmatpush2.msra.mxu0 0.0
    %348 = vmatprep.subr.mxu0 0.0
    %349 = vmatpush2.msra.mxu0 0.0
    %350 = vmatprep.mubr.f32.mxu0 0.0
    %351 = vmatmul.mubr.f32.gmra.mxu0 %v83
    %v352 = vpop.f32.mrf.mxu0
    %v353 = vadd.f32 0.0, %v352
    %v354 = vpop.f32.mrf.mxu0
    %355 = vmatprep.mubr.f32.mxu0 0.0
    %356 = vmatmul.mubr.f32.gmra.mxu0 %v86
    %v357 = vpop.f32.mrf.mxu0
    %v358 = vadd.f32 0.0, %v357
    %v359 = vpop.f32.mrf.mxu0
    %360 = vmatprep.mubr.f32.mxu0 0.0
    %361 = vmatmul.mubr.f32.gmra.mxu0 %v89
    %v362 = vpop.f32.mrf.mxu0
    %v363 = vadd.f32 0.0, %v362
    %v364 = vpop.f32.mrf.mxu0
    %365 = vmatprep.mubr.f32.mxu0 0.0
    %366 = vmatmul.mubr.f32.gmra.mxu0 %v92
    %v367 = vpop.f32.mrf.mxu0
    %v368 = vadd.f32 0.0, %v367
    %v369 = vpop.f32.mrf.mxu0
    %370 = vdwg.mxu0
    %v371 = vld [vmem:[%s4] sm:$0xff]
    %v372 = vld [vmem:[%s4 + $0x8] sm:$0xff]
    %v373 = vld [vmem:[%s4 + $0x10] sm:$0xff]
    %v374 = vld [vmem:[%s4 + $0x18] sm:$0xff]
    %v375 = vld [vmem:[%s4 + $0x20] sm:$0xff]
    %v376 = vld [vmem:[%s4 + $0x28] sm:$0xff]
    %v377 = vld [vmem:[%s4 + $0x30] sm:$0xff]
    %v378 = vld [vmem:[%s4 + $0x38] sm:$0xff]
    %v379 = vld [vmem:[%s4 + $0x40] sm:$0xff]
    %v380 = vld [vmem:[%s4 + $0x48] sm:$0xff]
    %v381 = vld [vmem:[%s4 + $0x50] sm:$0xff]
    %v382 = vld [vmem:[%s4 + $0x58] sm:$0xff]
    %v383 = vld [vmem:[%s4 + $0x60] sm:$0xff]
    %v384 = vld [vmem:[%s4 + $0x68] sm:$0xff]
    %v385 = vld [vmem:[%s4 + $0x70] sm:$0xff]
    %v386 = vld [vmem:[%s4 + $0x78] sm:$0xff]
    %v387 = vld [vmem:[#allocation8] sm:$0xff]
    %v388 = vld [vmem:[#allocation8 + $0x8] sm:$0xff]
    %v389 = vld [vmem:[#allocation8 + $0x10] sm:$0xff]
    %v390 = vld [vmem:[#allocation8 + $0x18] sm:$0xff]
    %v391 = vld [vmem:[#allocation8 + $0x20] sm:$0xff]
    %v392 = vld [vmem:[#allocation8 + $0x28] sm:$0xff]
    %v393 = vld [vmem:[#allocation8 + $0x30] sm:$0xff]
    %v394 = vld [vmem:[#allocation8 + $0x38] sm:$0xff]
    %v395 = vld [vmem:[#allocation8 + $0x40] sm:$0xff]
    %v396 = vld [vmem:[#allocation8 + $0x48] sm:$0xff]
    %v397 = vld [vmem:[#allocation8 + $0x50] sm:$0xff]
    %v398 = vld [vmem:[#allocation8 + $0x58] sm:$0xff]
    %v399 = vld [vmem:[#allocation8 + $0x60] sm:$0xff]
    %v400 = vld [vmem:[#allocation8 + $0x68] sm:$0xff]
    %v401 = vld [vmem:[#allocation8 + $0x70] sm:$0xff]
    %v402 = vld [vmem:[#allocation8 + $0x78] sm:$0xff]
    %v403 = vmul.f32 %v259, %v371
    %v404 = vmul.f32 %v264, %v372
    %v405 = vmul.f32 %v259, %v373
    %v406 = vmul.f32 %v264, %v374
    %v407 = vmul.f32 %v259, %v375
    %v408 = vmul.f32 %v264, %v376
    %v409 = vmul.f32 %v259, %v377
    %v410 = vmul.f32 %v264, %v378
    %v411 = vmul.f32 %v259, %v379
    %v412 = vmul.f32 %v264, %v380
    %v413 = vmul.f32 %v259, %v381
    %v414 = vmul.f32 %v264, %v382
    %v415 = vmul.f32 %v259, %v383
    %v416 = vmul.f32 %v264, %v384
    %v417 = vmul.f32 %v259, %v385
    %v418 = vmul.f32 %v264, %v386
    %v419 = vmul.f32 %v353, %v371
    %v420 = vmul.f32 %v358, %v372
    %v421 = vmul.f32 %v353, %v373
    %v422 = vmul.f32 %v358, %v374
    %v423 = vmul.f32 %v353, %v375
    %v424 = vmul.f32 %v358, %v376
    %v425 = vmul.f32 %v353, %v377
    %v426 = vmul.f32 %v358, %v378
    %v427 = vmul.f32 %v353, %v379
    %v428 = vmul.f32 %v358, %v380
    %v429 = vmul.f32 %v353, %v381
    %v430 = vmul.f32 %v358, %v382
    %v431 = vmul.f32 %v353, %v383
    %v432 = vmul.f32 %v358, %v384
    %v433 = vmul.f32 %v353, %v385
    %v434 = vmul.f32 %v358, %v386
    %v435 = vpack.c.bf16 %v420, %v419
    %v436 = vpack.c.bf16 %v422, %v421
    %v437 = vpack.c.bf16 %v424, %v423
    %v438 = vpack.c.bf16 %v426, %v425
    %v439 = vpack.c.bf16 %v428, %v427
    %v440 = vpack.c.bf16 %v430, %v429
    %v441 = vpack.c.bf16 %v432, %v431
    %v442 = vpack.c.bf16 %v434, %v433
    %v444 = vsel %vm81, %v179, 0
    %v447 = vsel %vm81, %v180, 0
    %v450 = vsel %vm81, %v403, 0
    %v453 = vsel %vm81, %v404, 0
    %v456 = vsel %vm81, %v405, 0
    %v459 = vsel %vm81, %v406, 0
    %v462 = vsel %vm81, %v407, 0
    %v465 = vsel %vm81, %v408, 0
    %v468 = vsel %vm81, %v409, 0
    %v471 = vsel %vm81, %v410, 0
    %v474 = vsel %vm81, %v411, 0
    %v477 = vsel %vm81, %v412, 0
    %v480 = vsel %vm81, %v413, 0
    %v483 = vsel %vm81, %v414, 0
    %v486 = vsel %vm81, %v415, 0
    %v489 = vsel %vm81, %v416, 0
    %v492 = vsel %vm81, %v417, 0
    %v495 = vsel %vm81, %v418, 0
    %497 = vmatprep.subr.mxu0 0.0
    %498 = vmatpush1.xpose.msra.mxu0 %v495
    %499 = vmatprep.subr.mxu0 0.0
    %500 = vmatpush1.xpose.msra.mxu0 %v492
    %501 = vmatprep.subr.mxu0 0.0
    %502 = vmatpush1.xpose.msra.mxu0 %v489
    %503 = vmatprep.subr.mxu0 0.0
    %504 = vmatpush1.xpose.msra.mxu0 %v486
    %505 = vmatprep.subr.mxu0 0.0
    %506 = vmatpush1.xpose.msra.mxu0 %v483
    %507 = vmatprep.subr.mxu0 0.0
    %508 = vmatpush1.xpose.msra.mxu0 %v480
    %509 = vmatprep.subr.mxu0 0.0
    %510 = vmatpush1.xpose.msra.mxu0 %v477
    %511 = vmatprep.subr.mxu0 0.0
    %512 = vmatpush1.xpose.msra.mxu0 %v474
    %513 = vmatprep.subr.mxu0 0.0
    %514 = vmatpush1.xpose.msra.mxu0 %v471
    %515 = vmatprep.subr.mxu0 0.0
    %516 = vmatpush1.xpose.msra.mxu0 %v468
    %517 = vmatprep.subr.mxu0 0.0
    %518 = vmatpush1.xpose.msra.mxu0 %v465
    %519 = vmatprep.subr.mxu0 0.0
    %520 = vmatpush1.xpose.msra.mxu0 %v462
    %521 = vmatprep.subr.mxu0 0.0
    %522 = vmatpush1.xpose.msra.mxu0 %v459
    %523 = vmatprep.subr.mxu0 0.0
    %524 = vmatpush1.xpose.msra.mxu0 %v456
    %525 = vmatprep.subr.mxu0 0.0
    %526 = vmatpush1.xpose.msra.mxu0 %v453
    %527 = vmatprep.subr.mxu0 0.0
    %528 = vmatpush1.xpose.msra.mxu0 %v450
    %529 = vmatprep.subr.mxu0 0.0
    %530 = vmatpush2.xpose.msra.mxu0 0.0
    %531 = vmatprep.subr.mxu0 0.0
    %532 = vmatpush2.xpose.msra.mxu0 0.0
    %533 = vmatprep.subr.mxu0 0.0
    %534 = vmatpush2.xpose.msra.mxu0 0.0
    %535 = vmatprep.subr.mxu0 0.0
    %536 = vmatpush2.xpose.msra.mxu0 0.0
    %537 = vmatprep.subr.mxu0 0.0
    %538 = vmatpush2.xpose.msra.mxu0 0.0
    %539 = vmatprep.subr.mxu0 0.0
    %540 = vmatpush2.xpose.msra.mxu0 0.0
    %541 = vmatprep.subr.mxu0 0.0
    %542 = vmatpush2.xpose.msra.mxu0 0.0
    %543 = vmatprep.subr.mxu0 0.0
    %544 = vmatpush2.xpose.msra.mxu0 0.0
    %545 = vmatprep.subr.mxu0 0.0
    %546 = vmatpush2.xpose.msra.mxu0 0.0
    %547 = vmatprep.subr.mxu0 0.0
    %548 = vmatpush2.xpose.msra.mxu0 0.0
    %549 = vmatprep.subr.mxu0 0.0
    %550 = vmatpush2.xpose.msra.mxu0 0.0
    %551 = vmatprep.subr.mxu0 0.0
    %552 = vmatpush2.xpose.msra.mxu0 0.0
    %553 = vmatprep.subr.mxu0 0.0
    %554 = vmatpush2.xpose.msra.mxu0 0.0
    %555 = vmatprep.subr.mxu0 0.0
    %556 = vmatpush2.xpose.msra.mxu0 0.0
    %557 = vmatprep.subr.mxu0 0.0
    %558 = vmatpush2.xpose.msra.mxu0 0.0
    %559 = vmatprep.subr.mxu0 0.0
    %560 = vmatpush2.xpose.msra.mxu0 0.0
    %561 = vmatprep.mubr.f32.mxu0 0.0
    %562 = vmatmul.mubr.f32.gmra.mxu0 %v444
    %v563 = vpop.f32.mrf.mxu0
    %v564 = vadd.f32 0.0, %v563
    %v565 = vpop.f32.mrf.mxu0
    %566 = vmatprep.mubr.f32.mxu0 0.0
    %567 = vmatmul.mubr.f32.gmra.mxu0 %v447
    %v568 = vpop.f32.mrf.mxu0
    %v569 = vadd.f32 0.0, %v568
    %v570 = vpop.f32.mrf.mxu0
    %571 = vdwg.mxu0
    %572 = vst [vmem:[#allocation10] sm:$0xff] %v564
    %573 = vst [vmem:[#allocation10 + $0x8] sm:$0xff] %v569
    %574 = vmax.xlane.f32.xlu0 %v564
    %v575 = vpop.xlane.xlu0 %574
    %576 = vmax.xlane.f32.xlu0 %v569
    %v577 = vpop.xlane.xlu0 %576
    %v578 = vsub.f32 %v564, %v575
    %v579 = vsub.f32 %v569, %v577
    %v580 = vmul.f32 %v578, 1.442695
    %v581 = vpow.pop %v580
    %v582 = vmul.f32 %v579, 1.442695
    %v583 = vpow.pop %v582
    %584 = vmatprep.subr.mxu0 0.0
    %585 = vmatpush1.msra.mxu0 %v402
    %586 = vmatprep.subr.mxu0 0.0
    %587 = vmatpush1.msra.mxu0 %v401
    %588 = vmatprep.subr.mxu0 0.0
    %589 = vmatpush1.msra.mxu0 %v400
    %590 = vmatprep.subr.mxu0 0.0
    %591 = vmatpush1.msra.mxu0 %v399
    %592 = vmatprep.subr.mxu0 0.0
    %593 = vmatpush1.msra.mxu0 %v398
    %594 = vmatprep.subr.mxu0 0.0
    %595 = vmatpush1.msra.mxu0 %v397
    %596 = vmatprep.subr.mxu0 0.0
    %597 = vmatpush1.msra.mxu0 %v396
    %598 = vmatprep.subr.mxu0 0.0
    %599 = vmatpush1.msra.mxu0 %v395
    %600 = vmatprep.subr.mxu0 0.0
    %601 = vmatpush1.msra.mxu0 %v394
    %602 = vmatprep.subr.mxu0 0.0
    %603 = vmatpush1.msra.mxu0 %v393
    %604 = vmatprep.subr.mxu0 0.0
    %605 = vmatpush1.msra.mxu0 %v392
    %606 = vmatprep.subr.mxu0 0.0
    %607 = vmatpush1.msra.mxu0 %v391
    %608 = vmatprep.subr.mxu0 0.0
    %609 = vmatpush1.msra.mxu0 %v390
    %610 = vmatprep.subr.mxu0 0.0
    %611 = vmatpush1.msra.mxu0 %v389
    %612 = vmatprep.subr.mxu0 0.0
    %613 = vmatpush1.msra.mxu0 %v388
    %614 = vmatprep.subr.mxu0 0.0
    %615 = vmatpush1.msra.mxu0 %v387
    %616 = vmatprep.subr.mxu0 0.0
    %617 = vmatpush2.msra.mxu0 0.0
    %618 = vmatprep.subr.mxu0 0.0
    %619 = vmatpush2.msra.mxu0 0.0
    %620 = vmatprep.subr.mxu0 0.0
    %621 = vmatpush2.msra.mxu0 0.0
    %622 = vmatprep.subr.mxu0 0.0
    %623 = vmatpush2.msra.mxu0 0.0
    %624 = vmatprep.subr.mxu0 0.0
    %625 = vmatpush2.msra.mxu0 0.0
    %626 = vmatprep.subr.mxu0 0.0
    %627 = vmatpush2.msra.mxu0 0.0
    %628 = vmatprep.subr.mxu0 0.0
    %629 = vmatpush2.msra.mxu0 0.0
    %630 = vmatprep.subr.mxu0 0.0
    %631 = vmatpush2.msra.mxu0 0.0
    %632 = vmatprep.subr.mxu0 0.0
    %633 = vmatpush2.msra.mxu0 0.0
    %634 = vmatprep.subr.mxu0 0.0
    %635 = vmatpush2.msra.mxu0 0.0
    %636 = vmatprep.subr.mxu0 0.0
    %637 = vmatpush2.msra.mxu0 0.0
    %638 = vmatprep.subr.mxu0 0.0
    %639 = vmatpush2.msra.mxu0 0.0
    %640 = vmatprep.subr.mxu0 0.0
    %641 = vmatpush2.msra.mxu0 0.0
    %642 = vmatprep.subr.mxu0 0.0
    %643 = vmatpush2.msra.mxu0 0.0
    %644 = vmatprep.subr.mxu0 0.0
    %645 = vmatpush2.msra.mxu0 0.0
    %646 = vmatprep.subr.mxu0 0.0
    %647 = vmatpush2.msra.mxu0 0.0
    %648 = vmatprep.mubr.f32.mxu0 0.0
    %649 = vmatmul.mubr.f32.gmra.mxu0 %v581
    %v650 = vpop.f32.mrf.mxu0
    %v651 = vadd.f32 0.0, %v650
    %v652 = vpop.f32.mrf.mxu0
    %653 = vmatprep.mubr.f32.mxu0 0.0
    %654 = vmatmul.mubr.f32.gmra.mxu0 %v583
    %v655 = vpop.f32.mrf.mxu0
    %v656 = vadd.f32 0.0, %v655
    %v657 = vpop.f32.mrf.mxu0
    %658 = vdwg.mxu0
    %v659 = vrcp.pop %v651
    %v660 = vrcp.pop %v656
    %v661 = vmul.f32 %v581, %v659
    %v662 = vmul.f32 %v583, %v660
    %v663 = vpack.c.bf16 %v662, %v661
    %664 = vmatprep.subr.bf16.mxu0 0
    %665 = vmatpush1.bf16.msra.mxu0 %v442
    %666 = vmatprep.subr.bf16.mxu0 0
    %667 = vmatpush1.bf16.msra.mxu0 %v441
    %668 = vmatprep.subr.bf16.mxu0 0
    %669 = vmatpush1.bf16.msra.mxu0 %v440
    %670 = vmatprep.subr.bf16.mxu0 0
    %671 = vmatpush1.bf16.msra.mxu0 %v439
    %672 = vmatprep.subr.bf16.mxu0 0
    %673 = vmatpush1.bf16.msra.mxu0 %v438
    %674 = vmatprep.subr.bf16.mxu0 0
    %675 = vmatpush1.bf16.msra.mxu0 %v437
    %676 = vmatprep.subr.bf16.mxu0 0
    %677 = vmatpush1.bf16.msra.mxu0 %v436
    %678 = vmatprep.subr.bf16.mxu0 0
    %679 = vmatpush1.bf16.msra.mxu0 %v435
    %680 = vmatprep.subr.bf16.mxu0 0
    %681 = vmatpush2.bf16.msra.mxu0 0
    %682 = vmatprep.subr.bf16.mxu0 0
    %683 = vmatpush2.bf16.msra.mxu0 0
    %684 = vmatprep.subr.bf16.mxu0 0
    %685 = vmatpush2.bf16.msra.mxu0 0
    %686 = vmatprep.subr.bf16.mxu0 0
    %687 = vmatpush2.bf16.msra.mxu0 0
    %688 = vmatprep.subr.bf16.mxu0 0
    %689 = vmatpush2.bf16.msra.mxu0 0
    %690 = vmatprep.subr.bf16.mxu0 0
    %691 = vmatpush2.bf16.msra.mxu0 0
    %692 = vmatprep.subr.bf16.mxu0 0
    %693 = vmatpush2.bf16.msra.mxu0 0
    %694 = vmatprep.subr.bf16.mxu0 0
    %695 = vmatpush2.bf16.msra.mxu0 0
    %696 = vmatprep.mubr.bf16.mxu0 0
    %697 = vmatmul.mubr.bf16.gmra.mxu0 %v663
    %v698 = vpop.f32.mrf.mxu0
    %v699 = vadd.f32 0.0, %v698
    %v700 = vpop.f32.mrf.mxu0
    %v701 = vpop.f32.mrf.mxu0
    %v702 = vadd.f32 0.0, %v701
    %v703 = vpop.f32.mrf.mxu0
    %704 = vdwg.mxu0
    %705 = vst.msk [vmem:[#allocation2] sm:$0xff] %vm81, %v699
    %706 = vst.msk [vmem:[#allocation2 + $0x8] sm:$0xff] %vm81, %v702
    %v707 = vmul.f32 %v269, %v371
    %v708 = vmul.f32 %v274, %v372
    %v709 = vmul.f32 %v269, %v373
    %v710 = vmul.f32 %v274, %v374
    %v711 = vmul.f32 %v269, %v375
    %v712 = vmul.f32 %v274, %v376
    %v713 = vmul.f32 %v269, %v377
    %v714 = vmul.f32 %v274, %v378
    %v715 = vmul.f32 %v269, %v379
    %v716 = vmul.f32 %v274, %v380
    %v717 = vmul.f32 %v269, %v381
    %v718 = vmul.f32 %v274, %v382
    %v719 = vmul.f32 %v269, %v383
    %v720 = vmul.f32 %v274, %v384
    %v721 = vmul.f32 %v269, %v385
    %v722 = vmul.f32 %v274, %v386
    %v723 = vmul.f32 %v363, %v371
    %v724 = vmul.f32 %v368, %v372
    %v725 = vmul.f32 %v363, %v373
    %v726 = vmul.f32 %v368, %v374
    %v727 = vmul.f32 %v363, %v375
    %v728 = vmul.f32 %v368, %v376
    %v729 = vmul.f32 %v363, %v377
    %v730 = vmul.f32 %v368, %v378
    %v731 = vmul.f32 %v363, %v379
    %v732 = vmul.f32 %v368, %v380
    %v733 = vmul.f32 %v363, %v381
    %v734 = vmul.f32 %v368, %v382
    %v735 = vmul.f32 %v363, %v383
    %v736 = vmul.f32 %v368, %v384
    %v737 = vmul.f32 %v363, %v385
    %v738 = vmul.f32 %v368, %v386
    %v739 = vpack.c.bf16 %v724, %v723
    %v740 = vpack.c.bf16 %v726, %v725
    %v741 = vpack.c.bf16 %v728, %v727
    %v742 = vpack.c.bf16 %v730, %v729
    %v743 = vpack.c.bf16 %v732, %v731
    %v744 = vpack.c.bf16 %v734, %v733
    %v745 = vpack.c.bf16 %v736, %v735
    %v746 = vpack.c.bf16 %v738, %v737
    %v748 = vsel %vm81, %v181, 0
    %v751 = vsel %vm81, %v182, 0
    %v754 = vsel %vm81, %v707, 0
    %v757 = vsel %vm81, %v708, 0
    %v760 = vsel %vm81, %v709, 0
    %v763 = vsel %vm81, %v710, 0
    %v766 = vsel %vm81, %v711, 0
    %v769 = vsel %vm81, %v712, 0
    %v772 = vsel %vm81, %v713, 0
    %v775 = vsel %vm81, %v714, 0
    %v778 = vsel %vm81, %v715, 0
    %v781 = vsel %vm81, %v716, 0
    %v784 = vsel %vm81, %v717, 0
    %v787 = vsel %vm81, %v718, 0
    %v790 = vsel %vm81, %v719, 0
    %v793 = vsel %vm81, %v720, 0
    %v796 = vsel %vm81, %v721, 0
    %v799 = vsel %vm81, %v722, 0
    %801 = vmatprep.subr.mxu0 0.0
    %802 = vmatpush1.xpose.msra.mxu0 %v799
    %803 = vmatprep.subr.mxu0 0.0
    %804 = vmatpush1.xpose.msra.mxu0 %v796
    %805 = vmatprep.subr.mxu0 0.0
    %806 = vmatpush1.xpose.msra.mxu0 %v793
    %807 = vmatprep.subr.mxu0 0.0
    %808 = vmatpush1.xpose.msra.mxu0 %v790
    %809 = vmatprep.subr.mxu0 0.0
    %810 = vmatpush1.xpose.msra.mxu0 %v787
    %811 = vmatprep.subr.mxu0 0.0
    %812 = vmatpush1.xpose.msra.mxu0 %v784
    %813 = vmatprep.subr.mxu0 0.0
    %814 = vmatpush1.xpose.msra.mxu0 %v781
    %815 = vmatprep.subr.mxu0 0.0
    %816 = vmatpush1.xpose.msra.mxu0 %v778
    %817 = vmatprep.subr.mxu0 0.0
    %818 = vmatpush1.xpose.msra.mxu0 %v775
    %819 = vmatprep.subr.mxu0 0.0
    %820 = vmatpush1.xpose.msra.mxu0 %v772
    %821 = vmatprep.subr.mxu0 0.0
    %822 = vmatpush1.xpose.msra.mxu0 %v769
    %823 = vmatprep.subr.mxu0 0.0
    %824 = vmatpush1.xpose.msra.mxu0 %v766
    %825 = vmatprep.subr.mxu0 0.0
    %826 = vmatpush1.xpose.msra.mxu0 %v763
    %827 = vmatprep.subr.mxu0 0.0
    %828 = vmatpush1.xpose.msra.mxu0 %v760
    %829 = vmatprep.subr.mxu0 0.0
    %830 = vmatpush1.xpose.msra.mxu0 %v757
    %831 = vmatprep.subr.mxu0 0.0
    %832 = vmatpush1.xpose.msra.mxu0 %v754
    %833 = vmatprep.subr.mxu0 0.0
    %834 = vmatpush2.xpose.msra.mxu0 0.0
    %835 = vmatprep.subr.mxu0 0.0
    %836 = vmatpush2.xpose.msra.mxu0 0.0
    %837 = vmatprep.subr.mxu0 0.0
    %838 = vmatpush2.xpose.msra.mxu0 0.0
    %839 = vmatprep.subr.mxu0 0.0
    %840 = vmatpush2.xpose.msra.mxu0 0.0
    %841 = vmatprep.subr.mxu0 0.0
    %842 = vmatpush2.xpose.msra.mxu0 0.0
    %843 = vmatprep.subr.mxu0 0.0
    %844 = vmatpush2.xpose.msra.mxu0 0.0
    %845 = vmatprep.subr.mxu0 0.0
    %846 = vmatpush2.xpose.msra.mxu0 0.0
    %847 = vmatprep.subr.mxu0 0.0
    %848 = vmatpush2.xpose.msra.mxu0 0.0
    %849 = vmatprep.subr.mxu0 0.0
    %850 = vmatpush2.xpose.msra.mxu0 0.0
    %851 = vmatprep.subr.mxu0 0.0
    %852 = vmatpush2.xpose.msra.mxu0 0.0
    %853 = vmatprep.subr.mxu0 0.0
    %854 = vmatpush2.xpose.msra.mxu0 0.0
    %855 = vmatprep.subr.mxu0 0.0
    %856 = vmatpush2.xpose.msra.mxu0 0.0
    %857 = vmatprep.subr.mxu0 0.0
    %858 = vmatpush2.xpose.msra.mxu0 0.0
    %859 = vmatprep.subr.mxu0 0.0
    %860 = vmatpush2.xpose.msra.mxu0 0.0
    %861 = vmatprep.subr.mxu0 0.0
    %862 = vmatpush2.xpose.msra.mxu0 0.0
    %863 = vmatprep.subr.mxu0 0.0
    %864 = vmatpush2.xpose.msra.mxu0 0.0
    %865 = vmatprep.mubr.f32.mxu0 0.0
    %866 = vmatmul.mubr.f32.gmra.mxu0 %v748
    %v867 = vpop.f32.mrf.mxu0
    %v868 = vadd.f32 0.0, %v867
    %v869 = vpop.f32.mrf.mxu0
    %870 = vmatprep.mubr.f32.mxu0 0.0
    %871 = vmatmul.mubr.f32.gmra.mxu0 %v751
    %v872 = vpop.f32.mrf.mxu0
    %v873 = vadd.f32 0.0, %v872
    %v874 = vpop.f32.mrf.mxu0
    %875 = vdwg.mxu0
    %876 = vst [vmem:[#allocation10 + $0x10] sm:$0xff] %v868
    %877 = vst [vmem:[#allocation10 + $0x18] sm:$0xff] %v873
    %878 = vmax.xlane.f32.xlu0 %v868
    %v879 = vpop.xlane.xlu0 %878
    %880 = vmax.xlane.f32.xlu0 %v873
    %v881 = vpop.xlane.xlu0 %880
    %v882 = vsub.f32 %v868, %v879
    %v883 = vsub.f32 %v873, %v881
    %v884 = vmul.f32 %v882, 1.442695
    %v885 = vpow.pop %v884
    %v886 = vmul.f32 %v883, 1.442695
    %v887 = vpow.pop %v886
    %888 = vmatprep.subr.mxu0 0.0
    %889 = vmatpush1.msra.mxu0 %v402
    %890 = vmatprep.subr.mxu0 0.0
    %891 = vmatpush1.msra.mxu0 %v401
    %892 = vmatprep.subr.mxu0 0.0
    %893 = vmatpush1.msra.mxu0 %v400
    %894 = vmatprep.subr.mxu0 0.0
    %895 = vmatpush1.msra.mxu0 %v399
    %896 = vmatprep.subr.mxu0 0.0
    %897 = vmatpush1.msra.mxu0 %v398
    %898 = vmatprep.subr.mxu0 0.0
    %899 = vmatpush1.msra.mxu0 %v397
    %900 = vmatprep.subr.mxu0 0.0
    %901 = vmatpush1.msra.mxu0 %v396
    %902 = vmatprep.subr.mxu0 0.0
    %903 = vmatpush1.msra.mxu0 %v395
    %904 = vmatprep.subr.mxu0 0.0
    %905 = vmatpush1.msra.mxu0 %v394
    %906 = vmatprep.subr.mxu0 0.0
    %907 = vmatpush1.msra.mxu0 %v393
    %908 = vmatprep.subr.mxu0 0.0
    %909 = vmatpush1.msra.mxu0 %v392
    %910 = vmatprep.subr.mxu0 0.0
    %911 = vmatpush1.msra.mxu0 %v391
    %912 = vmatprep.subr.mxu0 0.0
    %913 = vmatpush1.msra.mxu0 %v390
    %914 = vmatprep.subr.mxu0 0.0
    %915 = vmatpush1.msra.mxu0 %v389
    %916 = vmatprep.subr.mxu0 0.0
    %917 = vmatpush1.msra.mxu0 %v388
    %918 = vmatprep.subr.mxu0 0.0
    %919 = vmatpush1.msra.mxu0 %v387
    %920 = vmatprep.subr.mxu0 0.0
    %921 = vmatpush2.msra.mxu0 0.0
    %922 = vmatprep.subr.mxu0 0.0
    %923 = vmatpush2.msra.mxu0 0.0
    %924 = vmatprep.subr.mxu0 0.0
    %925 = vmatpush2.msra.mxu0 0.0
    %926 = vmatprep.subr.mxu0 0.0
    %927 = vmatpush2.msra.mxu0 0.0
    %928 = vmatprep.subr.mxu0 0.0
    %929 = vmatpush2.msra.mxu0 0.0
    %930 = vmatprep.subr.mxu0 0.0
    %931 = vmatpush2.msra.mxu0 0.0
    %932 = vmatprep.subr.mxu0 0.0
    %933 = vmatpush2.msra.mxu0 0.0
    %934 = vmatprep.subr.mxu0 0.0
    %935 = vmatpush2.msra.mxu0 0.0
    %936 = vmatprep.subr.mxu0 0.0
    %937 = vmatpush2.msra.mxu0 0.0
    %938 = vmatprep.subr.mxu0 0.0
    %939 = vmatpush2.msra.mxu0 0.0
    %940 = vmatprep.subr.mxu0 0.0
    %941 = vmatpush2.msra.mxu0 0.0
    %942 = vmatprep.subr.mxu0 0.0
    %943 = vmatpush2.msra.mxu0 0.0
    %944 = vmatprep.subr.mxu0 0.0
    %945 = vmatpush2.msra.mxu0 0.0
    %946 = vmatprep.subr.mxu0 0.0
    %947 = vmatpush2.msra.mxu0 0.0
    %948 = vmatprep.subr.mxu0 0.0
    %949 = vmatpush2.msra.mxu0 0.0
    %950 = vmatprep.subr.mxu0 0.0
    %951 = vmatpush2.msra.mxu0 0.0
    %952 = vmatprep.mubr.f32.mxu0 0.0
    %953 = vmatmul.mubr.f32.gmra.mxu0 %v885
    %v954 = vpop.f32.mrf.mxu0
    %v955 = vadd.f32 0.0, %v954
    %v956 = vpop.f32.mrf.mxu0
    %957 = vmatprep.mubr.f32.mxu0 0.0
    %958 = vmatmul.mubr.f32.gmra.mxu0 %v887
    %v959 = vpop.f32.mrf.mxu0
    %v960 = vadd.f32 0.0, %v959
    %v961 = vpop.f32.mrf.mxu0
    %962 = vdwg.mxu0
    %v963 = vrcp.pop %v955
    %v964 = vrcp.pop %v960
    %v965 = vmul.f32 %v885, %v963
    %v966 = vmul.f32 %v887, %v964
    %v967 = vpack.c.bf16 %v966, %v965
    %968 = vmatprep.subr.bf16.mxu0 0
    %969 = vmatpush1.bf16.msra.mxu0 %v746
    %970 = vmatprep.subr.bf16.mxu0 0
    %971 = vmatpush1.bf16.msra.mxu0 %v745
    %972 = vmatprep.subr.bf16.mxu0 0
    %973 = vmatpush1.bf16.msra.mxu0 %v744
    %974 = vmatprep.subr.bf16.mxu0 0
    %975 = vmatpush1.bf16.msra.mxu0 %v743
    %976 = vmatprep.subr.bf16.mxu0 0
    %977 = vmatpush1.bf16.msra.mxu0 %v742
    %978 = vmatprep.subr.bf16.mxu0 0
    %979 = vmatpush1.bf16.msra.mxu0 %v741
    %980 = vmatprep.subr.bf16.mxu0 0
    %981 = vmatpush1.bf16.msra.mxu0 %v740
    %982 = vmatprep.subr.bf16.mxu0 0
    %983 = vmatpush1.bf16.msra.mxu0 %v739
    %984 = vmatprep.subr.bf16.mxu0 0
    %985 = vmatpush2.bf16.msra.mxu0 0
    %986 = vmatprep.subr.bf16.mxu0 0
    %987 = vmatpush2.bf16.msra.mxu0 0
    %988 = vmatprep.subr.bf16.mxu0 0
    %989 = vmatpush2.bf16.msra.mxu0 0
    %990 = vmatprep.subr.bf16.mxu0 0
    %991 = vmatpush2.bf16.msra.mxu0 0
    %992 = vmatprep.subr.bf16.mxu0 0
    %993 = vmatpush2.bf16.msra.mxu0 0
    %994 = vmatprep.subr.bf16.mxu0 0
    %995 = vmatpush2.bf16.msra.mxu0 0
    %996 = vmatprep.subr.bf16.mxu0 0
    %997 = vmatpush2.bf16.msra.mxu0 0
    %998 = vmatprep.subr.bf16.mxu0 0
    %999 = vmatpush2.bf16.msra.mxu0 0
    %1000 = vmatprep.mubr.bf16.mxu0 0
    %1001 = vmatmul.mubr.bf16.gmra.mxu0 %v967
    %v1002 = vpop.f32.mrf.mxu0
    %v1003 = vadd.f32 0.0, %v1002
    %v1004 = vpop.f32.mrf.mxu0
    %v1005 = vpop.f32.mrf.mxu0
    %v1006 = vadd.f32 0.0, %v1005
    %v1007 = vpop.f32.mrf.mxu0
    %1008 = vdwg.mxu0
    %1009 = vst.msk [vmem:[#allocation2 + $0x10] sm:$0xff] %vm81, %v1003
    %1010 = vst.msk [vmem:[#allocation2 + $0x18] sm:$0xff] %vm81, %v1006
    %v1011 = vld [vmem:[#allocation2] sm:$0xff]
    %v1012 = vld [vmem:[#allocation2 + $0x8] sm:$0xff]
    %v1013 = vld [vmem:[#allocation2 + $0x10] sm:$0xff]
    %v1014 = vld [vmem:[#allocation2 + $0x18] sm:$0xff]
    %v1015 = vpack.c.bf16 %v1012, %v1011
    %v1016 = vpack.c.bf16 %v1014, %v1013
    %v1017 = vld [vmem:[#allocation6] sm:$0xf]
    %v1018 = vld [vmem:[#allocation6 + $0x4] sm:$0xf]
    %v1019 = vld [vmem:[#allocation6 + $0x8] sm:$0xf]
    %v1020 = vld [vmem:[#allocation6 + $0xc] sm:$0xf]
    %v1021 = vld [vmem:[#allocation6 + $0x10] sm:$0xf]
    %v1022 = vld [vmem:[#allocation6 + $0x14] sm:$0xf]
    %v1023 = vld [vmem:[#allocation6 + $0x18] sm:$0xf]
    %v1024 = vld [vmem:[#allocation6 + $0x1c] sm:$0xf]
    %v1025 = vld [vmem:[%s3] sm:$0x1]
    %v1027 = vlaneseq
    %v1028 = vshrl.u32 %v1027, 7
    %v1029 = vsub.s32 0, %v1028
    %v1030 = vrot.slane %v1025, %v1029
    %v1040 = vunpack.c.l.b16 %v1017
    %v1041 = vunpack.c.l.b16 %v1018
    %v1042 = vunpack.c.l.b16 %v1019
    %v1043 = vunpack.c.l.b16 %v1020
    %v1044 = vunpack.c.l.b16 %v1021
    %v1045 = vunpack.c.l.b16 %v1022
    %v1046 = vunpack.c.l.b16 %v1023
    %v1047 = vunpack.c.l.b16 %v1024
    %v1048 = vpack.c.b16 %v1041, %v1040
    %v1049 = vpack.c.b16 %v1043, %v1042
    %v1050 = vpack.c.b16 %v1045, %v1044
    %v1051 = vpack.c.b16 %v1047, %v1046
    %v1057 = vsel %vm81, %v1015, 0
    %v1060 = vsel %vm81, %v1016, 0
    %1062 = vmatprep.subr.bf16.mxu0 0
    %1063 = vmatpush1.bf16.msra.mxu0 0
    %1064 = vmatprep.subr.bf16.mxu0 0
    %1065 = vmatpush1.bf16.msra.mxu0 0
    %1066 = vmatprep.subr.bf16.mxu0 0
    %1067 = vmatpush1.bf16.msra.mxu0 0
    %1068 = vmatprep.subr.bf16.mxu0 0
    %1069 = vmatpush1.bf16.msra.mxu0 0
    %1070 = vmatprep.subr.bf16.mxu0 0
    %1071 = vmatpush1.bf16.msra.mxu0 %v1051
    %1072 = vmatprep.subr.bf16.mxu0 0
    %1073 = vmatpush1.bf16.msra.mxu0 %v1050
    %1074 = vmatprep.subr.bf16.mxu0 0
    %1075 = vmatpush1.bf16.msra.mxu0 %v1049
    %1076 = vmatprep.subr.bf16.mxu0 0
    %1077 = vmatpush1.bf16.msra.mxu0 %v1048
    %1078 = vmatprep.subr.bf16.mxu0 0
    %1079 = vmatpush2.bf16.msra.mxu0 0
    %1080 = vmatprep.subr.bf16.mxu0 0
    %1081 = vmatpush2.bf16.msra.mxu0 0
    %1082 = vmatprep.subr.bf16.mxu0 0
    %1083 = vmatpush2.bf16.msra.mxu0 0
    %1084 = vmatprep.subr.bf16.mxu0 0
    %1085 = vmatpush2.bf16.msra.mxu0 0
    %1086 = vmatprep.subr.bf16.mxu0 0
    %1087 = vmatpush2.bf16.msra.mxu0 0
    %1088 = vmatprep.subr.bf16.mxu0 0
    %1089 = vmatpush2.bf16.msra.mxu0 0
    %1090 = vmatprep.subr.bf16.mxu0 0
    %1091 = vmatpush2.bf16.msra.mxu0 0
    %1092 = vmatprep.subr.bf16.mxu0 0
    %1093 = vmatpush2.bf16.msra.mxu0 0
    %1094 = vmatprep.mubr.bf16.mxu0 0
    %1095 = vmatmul.mubr.bf16.gmra.mxu0 %v1057
    %v1096 = vpop.f32.mrf.mxu0
    %v1097 = vadd.f32 %v1030, %v1096
    %v1098 = vpop.f32.mrf.mxu0
    %v1099 = vpop.f32.mrf.mxu0
    %v1100 = vadd.f32 %v1030, %v1099
    %v1101 = vpop.f32.mrf.mxu0
    %1102 = vmatprep.mubr.bf16.mxu0 0
    %1103 = vmatmul.mubr.bf16.gmra.mxu0 %v1060
    %v1104 = vpop.f32.mrf.mxu0
    %v1105 = vadd.f32 %v1030, %v1104
    %v1106 = vpop.f32.mrf.mxu0
    %v1107 = vpop.f32.mrf.mxu0
    %v1108 = vadd.f32 %v1030, %v1107
    %v1109 = vpop.f32.mrf.mxu0
    %1110 = vdwg.mxu0
    %1111 = vst.msk [vmem:[#allocation9] sm:$0xff] %vm81, %v1097
    %1112 = vst.msk [vmem:[#allocation9 + $0x8] sm:$0xff] %vm81, %v1100
    %1113 = vst.msk [vmem:[#allocation9 + $0x10] sm:$0xff] %vm81, %v1105
    %1114 = vst.msk [vmem:[#allocation9 + $0x18] sm:$0xff] %vm81, %v1108
    // Predicated region
    $region38: #{tpu_custom_call.1} parent=1 // pred_check
      _
    $region39: #{tpu_custom_call.1} parent=1 // pred_check_branch
      %1116 = sbr.rel (0) target = $region41
    $region40: #{tpu_custom_call.1} parent=1 // pred_region
      %s1118 = ssub.s32 512, 512
      %1119 = vsyncadd [#allocation5], %s1118
      %s1120 = sshll.u32 [#allocation9], 4
      %s1121 = int_to_ptr.vmem [resolvable:$true] %s1120
      %1126 = dma.vmem_to_hbm [thread:$0]  %s1121, 512, %s6, [#allocation5], 128, 128, 8
    $region41: #{tpu_custom_call.1} parent=1 // pred_fallthru
      _
    // Predicated region
    $region42: #{tpu_custom_call.1} parent=1 // pred_check
      _
    $region43: #{tpu_custom_call.1} parent=1 // pred_check_branch
      %1128 = sbr.rel (0) target = $region45
    $region44: #{tpu_custom_call.1} parent=1 // pred_region
      %s1130 = ssub.s32 512, 512
      %1131 = vsyncadd [#allocation11], %s1130
      %s1132 = sshll.u32 [#allocation10], 4
      %s1133 = int_to_ptr.vmem [resolvable:$true] %s1132
      %1138 = dma.vmem_to_hbm [thread:$0]  %s1133, 512, %s7, [#allocation11], 128, 128, 8
    $region45: #{tpu_custom_call.1} parent=1 // pred_fallthru
      _
    // Predicated region
    $region46: #{tpu_custom_call.1} parent=1 // pred_check
      _
    $region47: #{tpu_custom_call.1} parent=1 // pred_check_branch
      %1140 = sbr.rel (0) target = $region49
    $region48: #{tpu_custom_call.1} parent=1 // pred_region
      %1141 = dma.done [#allocation5], 512
    $region49: #{tpu_custom_call.1} parent=1 // pred_fallthru
      _
    // Predicated region
    $region50: #{tpu_custom_call.1} parent=1 // pred_check
      _
    $region51: #{tpu_custom_call.1} parent=1 // pred_check_branch
      %1143 = sbr.rel (0) target = $region53
    $region52: #{tpu_custom_call.1} parent=1 // pred_region
      %1144 = dma.done [#allocation11], 512
    $region53: #{tpu_custom_call.1} parent=1 // pred_fallthru
      _
    %1145 = vsyncpa [#allocation4], 1
    %1146 = vsyncpa [#allocation7], 1
    %1147 = vsyncpa [#allocation5], 1
    %1148 = vsyncpa [#allocation11], 1

</llo_original>
